<compile_context>
chip_gen: v7x
topology: tpu7x:2x2x1
jax: 0.10.0
libtpu: 0.0.40
codegen_flags: <defaults>
</compile_context>

<pallas_src>
import functools

import jax
import jax.numpy as jnp
from jax import lax
from jax.experimental import pallas as pl
from jax.experimental.pallas import tpu as pltpu


# ----------------------------------------------------------------------------
# helpers
# ----------------------------------------------------------------------------
def _pick_tile(dim, candidates=(512, 256, 128)):
    """Largest candidate tile that evenly divides `dim`, else the full dim."""
    for c in candidates:
        if c <= dim and dim % c == 0:
            return c
    return dim


_VMEM_LIMIT = 32 * 1024 * 1024  # safe on v5e/v6e/v7x scoped-VMEM budgets


# ----------------------------------------------------------------------------
# Tiled linear kernels (grid = (M/tm, N/tn, K/tk), f32 accumulator)
# ----------------------------------------------------------------------------
def _matmul_kernel(x_ref, w_ref, o_ref, acc_ref):
    @pl.when(pl.program_id(2) == 0)
    def _():
        acc_ref[...] = jnp.zeros_like(acc_ref)

    acc_ref[...] += jnp.dot(x_ref[...], w_ref[...],
                            preferred_element_type=jnp.float32)

    @pl.when(pl.program_id(2) == pl.num_programs(2) - 1)
    def _():
        o_ref[...] = acc_ref[...].astype(o_ref.dtype)


def _matmul_bias_kernel(x_ref, w_ref, b_ref, o_ref, acc_ref):
    @pl.when(pl.program_id(2) == 0)
    def _():
        acc_ref[...] = jnp.zeros_like(acc_ref)

    acc_ref[...] += jnp.dot(x_ref[...], w_ref[...],
                            preferred_element_type=jnp.float32)

    @pl.when(pl.program_id(2) == pl.num_programs(2) - 1)
    def _():
        o_ref[...] = (acc_ref[...] + b_ref[...]).astype(o_ref.dtype)


def linear_pallas(x, w, b=None, *, out_dtype=None):
    """y = x @ w (+ b)  with x:(M,K), w:(K,N), b:(N,) or None."""
    M, K = x.shape
    K2, N = w.shape
    assert K == K2, "weight / activation K mismatch"
    out_dtype = out_dtype or x.dtype

    tm = _pick_tile(M)
    tn = _pick_tile(N, (256, 128))
    tk = _pick_tile(K)
    assert M % tm == 0 and N % tn == 0 and K % tk == 0

    in_specs = [
        pl.BlockSpec((tm, tk), lambda i, j, k: (i, k)),
        pl.BlockSpec((tk, tn), lambda i, j, k: (k, j)),
    ]
    args = [x, w]
    if b is not None:
        in_specs.append(pl.BlockSpec((1, tn), lambda i, j, k: (0, j)))
        args.append(b.reshape(1, N))
        kernel = _matmul_bias_kernel
    else:
        kernel = _matmul_kernel

    return pl.pallas_call(
        kernel,
        out_shape=jax.ShapeDtypeStruct((M, N), out_dtype),
        grid_spec=pltpu.PrefetchScalarGridSpec(
            num_scalar_prefetch=0,
            grid=(M // tm, N // tn, K // tk),
            in_specs=in_specs,
            out_specs=pl.BlockSpec((tm, tn), lambda i, j, k: (i, j)),
            scratch_shapes=[pltpu.VMEM((tm, tn), jnp.float32)],
        ),
        compiler_params=pltpu.CompilerParams(
            dimension_semantics=("parallel", "parallel", "arbitrary"),
            vmem_limit_bytes=_VMEM_LIMIT,
        ),
    )(*args)


# ----------------------------------------------------------------------------
# Flash attention kernel
#   qkv layout: (B, N, 3*H*Dh) = [q(h d) | k(h d) | v(h d)]
#   grid: (B, head_group, N/tq, N/tk); head_group covers `hb` heads so that the
#   block last dim (hb*Dh) is a multiple of 128 lanes.
# ----------------------------------------------------------------------------
def _flash_attn_kernel(q_ref, k_ref, v_ref, o_ref, m_ref, l_ref, acc_ref,
                       *, hb, dh):
    ki = pl.program_id(3)

    @pl.when(ki == 0)
    def _():
        m_ref[...] = jnp.full_like(m_ref, -jnp.inf)
        l_ref[...] = jnp.zeros_like(l_ref)
        acc_ref[...] = jnp.zeros_like(acc_ref)

    q = q_ref[0]          # (tq, hb*dh)  (softmax scale already folded into Wq)
    k = k_ref[0]          # (tk, hb*dh)
    v = v_ref[0]          # (tk, hb*dh)

    for h in range(hb):
        sl = slice(h * dh, (h + 1) * dh)
        qh, kh, vh = q[:, sl], k[:, sl], v[:, sl]

        # scores: contract last dims directly (no transposed K tile).
        s = lax.dot_general(qh, kh, (((1,), (1,)), ((), ())),
                            preferred_element_type=jnp.float32)   # (tq, tk)

        m_prev = m_ref[h]                                          # (tq, 1)
        l_prev = l_ref[h]
        m_new = jnp.maximum(m_prev, jnp.max(s, axis=-1, keepdims=True))
        alpha = jnp.exp(m_prev - m_new)
        p = jnp.exp(s - m_new)

        l_ref[h] = alpha * l_prev + jnp.sum(p, axis=-1, keepdims=True)
        acc_ref[h] = alpha * acc_ref[h] + lax.dot_general(
            p.astype(vh.dtype), vh, (((1,), (0,)), ((), ())),
            preferred_element_type=jnp.float32)                    # (tq, dh)
        m_ref[h] = m_new

    @pl.when(ki == pl.num_programs(3) - 1)
    def _():
        outs = [acc_ref[h] * pl.reciprocal(l_ref[h], approx=True)
                for h in range(hb)]
        o_ref[0] = jnp.concatenate(outs, axis=-1).astype(o_ref.dtype)


def flash_attention_pallas(qkv, *, heads, dim_head, out_dtype):
    """qkv: (B, N, 3*heads*dim_head) -> out: (B, N, heads*dim_head)."""
    B, N, three_inner = qkv.shape
    inner = heads * dim_head
    assert three_inner == 3 * inner

    hb = max(1, 128 // dim_head) if dim_head < 128 else 1
    assert heads % hb == 0, "heads must be divisible by heads-per-block"
    G = heads // hb
    blk = hb * dim_head

    tq = _pick_tile(N, (256, 128))
    tk = _pick_tile(N, (512, 256, 128))
    assert N % tq == 0 and N % tk == 0

    def q_map(b, g, qi, ki):
        return (b, qi, g)

    def k_map(b, g, qi, ki):
        return (b, ki, G + g)

    def v_map(b, g, qi, ki):
        return (b, ki, 2 * G + g)

    def o_map(b, g, qi, ki):
        return (b, qi, g)

    kern = functools.partial(_flash_attn_kernel, hb=hb, dh=dim_head)
    return pl.pallas_call(
        kern,
        out_shape=jax.ShapeDtypeStruct((B, N, inner), out_dtype),
        grid_spec=pltpu.PrefetchScalarGridSpec(
            num_scalar_prefetch=0,
            grid=(B, G, N // tq, N // tk),
            in_specs=[
                pl.BlockSpec((1, tq, blk), q_map),
                pl.BlockSpec((1, tk, blk), k_map),
                pl.BlockSpec((1, tk, blk), v_map),
            ],
            out_specs=pl.BlockSpec((1, tq, blk), o_map),
            scratch_shapes=[
                pltpu.VMEM((hb, tq, 1), jnp.float32),          # running max
                pltpu.VMEM((hb, tq, 1), jnp.float32),          # running denom
                pltpu.VMEM((hb, tq, dim_head), jnp.float32),   # f32 accumulator
            ],
        ),
        compiler_params=pltpu.CompilerParams(
            dimension_semantics=("parallel", "parallel", "parallel", "arbitrary"),
            vmem_limit_bytes=_VMEM_LIMIT,
        ),
    )(qkv, qkv, qkv)   # same array, three views (q / k / v column blocks)


# ----------------------------------------------------------------------------
# Module wrapper
# ----------------------------------------------------------------------------
class FlashSelfAttnWG:
    def __init__(self, query_dim, heads=8, dim_head=64, dropout=0.0, key=None,
                 compute_dtype=jnp.bfloat16):
        inner = heads * dim_head
        self.heads = heads
        self.dim_head = dim_head
        self.scale = dim_head ** (-0.5)
        self.compute_dtype = compute_dtype

        if key is None:
            key = jax.random.PRNGKey(0)
        k1, k2, k3, k4, k5 = jax.random.split(key, 5)
        # PyTorch Linear default init: U(-1/sqrt(fan_in), 1/sqrt(fan_in)),
        # weights kept pre-transposed as (in, out).
        lim_q = 1.0 / (query_dim ** 0.5)
        lim_i = 1.0 / (inner ** 0.5)
        wq = jax.random.uniform(k1, (query_dim, inner), jnp.float32, -lim_q, lim_q)
        wk = jax.random.uniform(k2, (query_dim, inner), jnp.float32, -lim_q, lim_q)
        wv = jax.random.uniform(k3, (query_dim, inner), jnp.float32, -lim_q, lim_q)
        # Fold the softmax scale into the query projection: (x@wq)*s == x@(wq*s).
        self.w_qkv = jnp.concatenate([wq * self.scale, wk, wv],
                                     axis=1).astype(compute_dtype)
        self.wo = jax.random.uniform(k4, (inner, query_dim), jnp.float32,
                                     -lim_i, lim_i).astype(compute_dtype)
        self.bo = jax.random.uniform(k5, (query_dim,), jnp.float32, -lim_i, lim_i)
        # TODO(synk): nn.Dropout(p=dropout) is identity at p=0.0 / eval mode;
        # training-mode dropout is not implemented.

    def __call__(self, x):
        in_shape = x.shape
        if x.ndim == 4:                     # 'b k n d' -> fold (b k) into batch
            b0, b1, N, D = x.shape
            x3 = x.reshape(b0 * b1, N, D)
        elif x.ndim == 3:
            x3 = x
        else:
            raise ValueError(f"unsupported x shape: {x.shape}")

        B, N, D = x3.shape
        h, dh = self.heads, self.dim_head
        inner = h * dh
        cd = self.compute_dtype

        xf = x3.reshape(B * N, D).astype(cd)
        # Fused, bias-free QKV projection: x read once, output (B*N, 3*inner).
        qkv = linear_pallas(xf, self.w_qkv, None, out_dtype=cd)
        qkv = qkv.reshape(B, N, 3 * inner)

        # Flash attention directly in head-merged layout -> (B, N, inner).
        attn = flash_attention_pallas(qkv, heads=h, dim_head=dh, out_dtype=cd)

        # Output projection (with bias), back to input dtype.
        y = linear_pallas(attn.reshape(B * N, inner), self.wo, self.bo,
                          out_dtype=x.dtype)
        return y.reshape(in_shape)


# ----------------------------------------------------------------------------
# Reference (plain JAX, mirroring the kernel's bf16 casts) for verification
# ----------------------------------------------------------------------------
def reference_forward(mod, x):
    B, N, D = x.shape
    h, dh = mod.heads, mod.dim_head
    inner = h * dh
    cd = mod.compute_dtype

    xf = x.astype(cd).reshape(B * N, D)
    qkv = jnp.dot(xf, mod.w_qkv, preferred_element_type=jnp.float32).astype(cd)
    qkv = qkv.reshape(B, N, 3, h, dh)
    q, k, v = qkv[:, :, 0], qkv[:, :, 1], qkv[:, :, 2]   # (B, N, h, dh), scale in q

    s = jnp.einsum("bqhd,bkhd->bhqk", q, k, preferred_element_type=jnp.float32)
    p = jax.nn.softmax(s, axis=-1)
    o = jnp.einsum("bhqk,bkhd->bqhd", p.astype(cd), v,
                   preferred_element_type=jnp.float32)
    o = o.reshape(B, N, inner).astype(cd)

    out = jnp.dot(o.reshape(B * N, inner), mod.wo,
                  preferred_element_type=jnp.float32) + mod.bo
    return out.astype(x.dtype).reshape(B, N, D)


if __name__ == "__main__":
    key = jax.random.PRNGKey(0)
    kx, kw = jax.random.split(key)

    B, N = 2, 128
    heads, dim_head = 2, 64
    query_dim = heads * dim_head  # .view(inputx_shape) requires inner_dim == query_dim

    x = jax.random.normal(kx, (B, N, query_dim), jnp.float32)
    mod = FlashSelfAttnWG(query_dim, heads=heads, dim_head=dim_head, key=kw)

    out = jax.block_until_ready(mod(x))
    ref = reference_forward(mod, x)

    assert out.shape == x.shape
    assert jnp.allclose(out, ref, rtol=2e-2, atol=2e-2), "mismatch vs reference"

    print("KERNEL_OK")
</pallas_src>

<mosaic_0001>
module attributes {stable_mosaic.version = 11 : i64} {
  func.func @_matmul_kernel(%arg0: i32, %arg1: i32, %arg2: i32, %arg3: memref<256x128xbf16, #tpu.memory_space<vmem>>, %arg4: memref<128x128xbf16, #tpu.memory_space<vmem>>, %arg5: memref<256x128xbf16, #tpu.memory_space<vmem>>, %arg6: memref<256x128xf32, #tpu.memory_space<vmem>>) attributes {dimension_semantics = [#tpu.dimension_semantics<parallel>, #tpu.dimension_semantics<parallel>, #tpu.dimension_semantics<arbitrary>], iteration_bounds = array<i64: 1, 3, 1>, scalar_prefetch = 0 : i64, scratch_operands = 1 : i64, tpu.core_type = #tpu.core_type<tc>, window_params = [{transform_indices = @transform_0, window_bounds = array<i64: 256, 128>}, {transform_indices = @transform_1, window_bounds = array<i64: 128, 128>}, {transform_indices = @transform_2, window_bounds = array<i64: 256, 128>}]} {
    %c0_i32 = arith.constant 0 : i32
    %0 = arith.cmpi eq, %arg2, %c0_i32 : i32
    %1 = arith.extui %0 : i1 to i32
    %c0_i32_0 = arith.constant 0 : i32
    %2 = arith.cmpi ne, %1, %c0_i32_0 : i32
    scf.if %2 {
      %cst_10 = arith.constant 0.000000e+00 : f32
      %12 = vector.broadcast %cst_10 : f32 to vector<256x128xf32>
      %c0_11 = arith.constant 0 : index
      %c0_12 = arith.constant 0 : index
      %13 = vector.load %arg6[%c0_11, %c0_12] : memref<256x128xf32, #tpu.memory_space<vmem>>, vector<256x128xf32>
      tpu.vector_store %arg6[%c0_11, %c0_12], %12 {strides = array<i32>} : memref<256x128xf32, #tpu.memory_space<vmem>>, vector<256x128xf32>,
    } else {
    }
    %c0 = arith.constant 0 : index
    %c0_1 = arith.constant 0 : index
    %3 = vector.load %arg6[%c0, %c0_1] : memref<256x128xf32, #tpu.memory_space<vmem>>, vector<256x128xf32>
    %c0_2 = arith.constant 0 : index
    %c0_3 = arith.constant 0 : index
    %4 = vector.load %arg3[%c0_2, %c0_3] : memref<256x128xbf16, #tpu.memory_space<vmem>>, vector<256x128xbf16>
    %c0_4 = arith.constant 0 : index
    %c0_5 = arith.constant 0 : index
    %5 = vector.load %arg4[%c0_4, %c0_5] : memref<128x128xbf16, #tpu.memory_space<vmem>>, vector<128x128xbf16>
    %cst = arith.constant dense<0.000000e+00> : vector<256x128xf32>
    %6 = tpu.matmul %4, %5, %cst {dimension_numbers = #tpu.dot_dimension_numbers<[1], [0], [0], [1], [0, 0, 1, 1], [], []>} : vector<256x128xbf16>, vector<128x128xbf16>, vector<256x128xf32> -> vector<256x128xf32>
    %7 = arith.addf %3, %6 : vector<256x128xf32>
    %c0_6 = arith.constant 0 : index
    %c0_7 = arith.constant 0 : index
    %8 = vector.load %arg6[%c0_6, %c0_7] : memref<256x128xf32, #tpu.memory_space<vmem>>, vector<256x128xf32>
    tpu.vector_store %arg6[%c0_6, %c0_7], %7 {strides = array<i32>} : memref<256x128xf32, #tpu.memory_space<vmem>>, vector<256x128xf32>,
    %c0_i32_8 = arith.constant 0 : i32
    %9 = arith.cmpi eq, %arg2, %c0_i32_8 : i32
    %10 = arith.extui %9 : i1 to i32
    %c0_i32_9 = arith.constant 0 : i32
    %11 = arith.cmpi ne, %10, %c0_i32_9 : i32
    scf.if %11 {
      %c0_10 = arith.constant 0 : index
      %c0_11 = arith.constant 0 : index
      %12 = vector.load %arg6[%c0_10, %c0_11] : memref<256x128xf32, #tpu.memory_space<vmem>>, vector<256x128xf32>
      %13 = arith.truncf %12 : vector<256x128xf32> to vector<256x128xbf16>
      %c0_12 = arith.constant 0 : index
      %c0_13 = arith.constant 0 : index
      %14 = vector.load %arg5[%c0_12, %c0_13] : memref<256x128xbf16, #tpu.memory_space<vmem>>, vector<256x128xbf16>
      tpu.vector_store %arg5[%c0_12, %c0_13], %13 {strides = array<i32>} : memref<256x128xbf16, #tpu.memory_space<vmem>>, vector<256x128xbf16>,
    } else {
    }
    return
  }
  func.func @transform_0(%arg0: i32, %arg1: i32, %arg2: i32) -> (i32, i32) {
    %c0_i32 = arith.constant 0 : i32
    return %arg0, %arg2 : i32, i32
  }
  func.func @transform_1(%arg0: i32, %arg1: i32, %arg2: i32) -> (i32, i32) {
    %c0_i32 = arith.constant 0 : i32
    return %arg2, %arg1 : i32, i32
  }
  func.func @transform_2(%arg0: i32, %arg1: i32, %arg2: i32) -> (i32, i32) {
    %c0_i32 = arith.constant 0 : i32
    return %arg0, %arg1 : i32, i32
  }
}

</mosaic_0001>

<llo_original>
// kernel: tpu_custom_call.1
$region0: #{tpu_custom_call.1}
  #allocation0 [shape = 'u32[]', space=smem, size = 0x4, offset = 0x4, fixed_abs, tag = 'smem constant byte address 0x4 - core index']
  #allocation1 [shape = 'u32[144,128]{1,0:T(1,128)}', space=vmem, size = 0x12000, scoped, tag = 'internal scratch']
  #allocation2 [shape = 'f32[256,128]{1,0:T(8,128)}', space=vmem, size = 0x20000, scoped, tag = 'scratch operand']
  %s0 = inlined_call_operand.hbm [shape: bf16[256,128], index: 0, kind: input, shape index: {}]
  %s1 = inlined_call_operand.hbm [shape: bf16[128,384], index: 1, kind: input, shape index: {}]
  %s2 = inlined_call_operand.hbm [shape: bf16[256,384], index: 2, kind: output, shape index: {}]
  %s3 = sld [smem:[#allocation0]]
  $region57: #{tpu_custom_call.1} parent=0
    _
  %s5 = ssub.s32 1, %s3
  %s6 = scalar_select 0, %s5, %s3
  $region1: #{tpu_custom_call.1} parent=0
    #allocation3 [shape = 'u8[65536]{0}', space=vmem, size = 0x10000, scoped, tag = 'input window, operand 0, single buffered']
    #allocation4 [shape = 's32[2]{0}', space=sflag, size = 0x8, scoped, tag = 'scoped memory for tpu_custom_call.1']
    #allocation5 [shape = 's32[2]{0}', space=sflag, size = 0x8, scoped, tag = 'scoped memory for tpu_custom_call.1']
    #allocation6 [shape = 'u8[65536]{0}', space=vmem, size = 0x10000, scoped, tag = 'input window, operand 1']
    #allocation7 [shape = 's32[2]{0}', space=sflag, size = 0x8, scoped, tag = 'scoped memory for tpu_custom_call.1']
    #allocation8 [shape = 'u8[131072]{0}', space=vmem, size = 0x20000, scoped, tag = 'output window, operand 0']
    %7 = vsyncpa [#allocation4], 0
    %8 = vsyncpa [#allocation7], 0
    %s9 = scalar_lea.sflag [#allocation7], 1
    %10 = vsyncpa %s9, 0
    %11 = vsyncpa [#allocation5], 0
    %s12 = scalar_lea.sflag [#allocation5], 1
    %13 = vsyncpa %s12, 0
    loop: start=0, step=1, limit=5
    $region2: #{tpu_custom_call.1} parent=1 // loop_pre_header
      _
    $region3: #{tpu_custom_call.1} parent=1 // loop_header
      %s15 = sphi 0, %s19
      %p16 = scmp.ge.s32.totalorder %s15, 5
      %s22 = sphi 0, %s41
      %s23 = sphi 0, %s37
      %s24 = sphi 0, %s33
      %s25 = sphi 0, %s22
      %s26 = sphi 0, %s23
      %s27 = sphi 0, %s24
      %s28 = sphi 0, %s25
      %s29 = sphi 0, %s26
      %s30 = sphi 0, %s27
      %s46 = sphi 0, %s48
      %s49 = sphi 0, %s46
      %s50 = sphi 0, %s49
      %s66 = sphi 0, %s50
      %s74 = sphi 0, %s76
      %s77 = sphi 0, %s74
      %s78 = sphi 0, %s77
      %s94 = sphi 0, %s78
      %s102 = sphi 0, %s104
      %s105 = sphi 0, %s102
      %s106 = sphi 0, %s105
      %s122 = sphi 0, %s106
    $region4: #{tpu_custom_call.1} parent=1 // loop_header_branch
      %18 = sbr.rel (%p16) target = $region8
    $region5: #{tpu_custom_call.1} parent=1 // loop_body
      %s20 = ssub.s32 %s15, 1
      %s21 = ssub.s32 %s15, 2
      %s31 = sadd.s32 1, %s24
      %p32 = scmp.ge.s32.totalorder %s31, 1
      %s33 = scalar_select %p32, 0, %s31
      %s34 = sadd.s32 1, %s23
      %s35 = scalar_select %p32, %s34, %s23
      %p36 = scmp.ge.s32.totalorder %s35, 3
      %s37 = scalar_select %p36, 0, %s35
      %s38 = sadd.s32 1, %s22
      %s39 = scalar_select %p36, %s38, %s22
      %p40 = scmp.ge.s32.totalorder %s39, 1
      %s41 = scalar_select %p40, 0, %s39
      %s42 = ssub.s32 %s22, %s41
      %s43 = ssub.s32 %s24, %s33
      %s44 = sor.u32 %s42, %s43
      %p45 = scmp.eq.s32.totalorder %s44, 0
      %s47 = sadd.s32 %s46, 1
      %s48 = scalar_select %p45, %s46, %s47
      %p51 = pneg %p45
      %p52 = scmp.eq.s32.totalorder %s15, 2
      %p53 = por %p51, %p52
      %p54 = scmp.ne.s32.totalorder %s46, %s49
      %p55 = scmp.eq.s32.totalorder %s15, 0
      %p56 = por %p54, %p55
      %p57 = scmp.ne.s32.totalorder %s46, %s49
      %p58 = scmp.eq.s32.totalorder %s20, 2
      %p59 = por %p57, %p58
      %p60 = scmp.ne.s32.totalorder %s49, %s50
      %p61 = scmp.eq.s32.totalorder %s20, 0
      %p62 = por %p60, %p61
      %p63 = scmp.ne.s32.totalorder %s49, %s50
      %p64 = scmp.eq.s32.totalorder %s21, 2
      %p65 = por %p63, %p64
      %p67 = scmp.ne.s32.totalorder %s50, %s66
      %p68 = scmp.eq.s32.totalorder %s21, 0
      %p69 = por %p67, %p68
      %s70 = ssub.s32 %s24, %s33
      %s71 = ssub.s32 %s23, %s37
      %s72 = sor.u32 %s70, %s71
      %p73 = scmp.eq.s32.totalorder %s72, 0
      %s75 = sadd.s32 %s74, 1
      %s76 = scalar_select %p73, %s74, %s75
      %p79 = pneg %p73
      %p80 = scmp.eq.s32.totalorder %s15, 2
      %p81 = por %p79, %p80
      %p82 = scmp.ne.s32.totalorder %s74, %s77
      %p83 = scmp.eq.s32.totalorder %s15, 0
      %p84 = por %p82, %p83
      %p85 = scmp.ne.s32.totalorder %s74, %s77
      %p86 = scmp.eq.s32.totalorder %s20, 2
      %p87 = por %p85, %p86
      %p88 = scmp.ne.s32.totalorder %s77, %s78
      %p89 = scmp.eq.s32.totalorder %s20, 0
      %p90 = por %p88, %p89
      %p91 = scmp.ne.s32.totalorder %s77, %s78
      %p92 = scmp.eq.s32.totalorder %s21, 2
      %p93 = por %p91, %p92
      %p95 = scmp.ne.s32.totalorder %s78, %s94
      %p96 = scmp.eq.s32.totalorder %s21, 0
      %p97 = por %p95, %p96
      %s98 = ssub.s32 %s22, %s41
      %s99 = ssub.s32 %s23, %s37
      %s100 = sor.u32 %s98, %s99
      %p101 = scmp.eq.s32.totalorder %s100, 0
      %s103 = sadd.s32 %s102, 1
      %s104 = scalar_select %p101, %s102, %s103
      %p107 = pneg %p101
      %p108 = scmp.eq.s32.totalorder %s15, 2
      %p109 = por %p107, %p108
      %p110 = scmp.ne.s32.totalorder %s102, %s105
      %p111 = scmp.eq.s32.totalorder %s15, 0
      %p112 = por %p110, %p111
      %p113 = scmp.ne.s32.totalorder %s102, %s105
      %p114 = scmp.eq.s32.totalorder %s20, 2
      %p115 = por %p113, %p114
      %p116 = scmp.ne.s32.totalorder %s105, %s106
      %p117 = scmp.eq.s32.totalorder %s20, 0
      %p118 = por %p116, %p117
      %p119 = scmp.ne.s32.totalorder %s105, %s106
      %p120 = scmp.eq.s32.totalorder %s21, 2
      %p121 = por %p119, %p120
      %p123 = scmp.ne.s32.totalorder %s106, %s122
      %p124 = scmp.eq.s32.totalorder %s21, 0
      %p125 = por %p123, %p124
      %p126 = scmp.le.s32.totalorder 1, %s15
      %p127 = scmp.lt.s32.totalorder %s15, 4
      %p128 = pnand %p126, %p127
      %p129 = pneg %p128
      // Predicated region
      $region9: #{tpu_custom_call.1} parent=5 // pred_check
        _
      $region10: #{tpu_custom_call.1} parent=5 // pred_check_branch
        %131 = sbr.rel (%p128) target = $region12
      $region11: #{tpu_custom_call.1} parent=5 // pred_region
        %s132 = ssub.s32 %s15, 1
        // Predicated region
        $region13: #{tpu_custom_call.1} parent=11 // pred_check
          %p133 = pneg %p62
        $region14: #{tpu_custom_call.1} parent=11 // pred_check_branch
          %135 = sbr.rel (%p133) target = $region16
        $region15: #{tpu_custom_call.1} parent=11 // pred_region
          %s136 = smul.u32 32, %s25
          %s138 = ssub.s32 2048, 2048
          %139 = vsyncadd [#allocation4], %s138
          %s140 = sadd.s32 %s27, %s136
          %s141 = smul.addr %s140, 64
          %s142 = scalar_lea.hbm %s0, %s141
          %s143 = sshll.u32 [#allocation3], 4
          %s144 = int_to_ptr.vmem [resolvable:$true] %s143
          %149 = dma.hbm_to_vmem [thread:$0]  %s142, 2048, %s144, [#allocation4], 64, 64, 4
        $region16: #{tpu_custom_call.1} parent=11 // pred_fallthru
          _
      $region12: #{tpu_custom_call.1} parent=5 // pred_fallthru
        _
      %p150 = scmp.lt.s32.totalorder %s15, 3
      // Predicated region
      $region17: #{tpu_custom_call.1} parent=5 // pred_check
        %p151 = pneg %p150
      $region18: #{tpu_custom_call.1} parent=5 // pred_check_branch
        %153 = sbr.rel (%p151) target = $region20
      $region19: #{tpu_custom_call.1} parent=5 // pred_region
        // Predicated region
        $region21: #{tpu_custom_call.1} parent=19 // pred_check
          %p154 = pneg %p84
        $region22: #{tpu_custom_call.1} parent=19 // pred_check_branch
          %156 = sbr.rel (%p154) target = $region24
        $region23: #{tpu_custom_call.1} parent=19 // pred_region
          %s157 = sand.u32 %s74, 1
          %s158 = scalar_lea.sflag [#allocation7], %s157
          %s159 = sand.u32 %s74, 1
          %s160 = smul.addr %s159, 64
          %s161 = scalar_lea.vmem [#allocation6], %s160
          %s162 = smul.u32 16, %s24
          %s164 = ssub.s32 1024, 1024
          %165 = vsyncadd %s158, %s164
          %s166 = smul.addr %s162, 3
          %s167 = sadd.s32 %s23, %s166
          %s168 = smul.addr %s167, 64
          %s169 = scalar_lea.hbm %s1, %s168
          %s170 = sshll.u32 %s161, 4
          %s171 = int_to_ptr.vmem [resolvable:$true] %s170
          %176 = dma.hbm_to_vmem [thread:$0]  %s169, 1024, %s171, %s158, 192, 64, 4
        $region24: #{tpu_custom_call.1} parent=19 // pred_fallthru
          _
      $region20: #{tpu_custom_call.1} parent=5 // pred_fallthru
        _
      %p177 = scmp.le.s32.totalorder 1, %s15
      %p178 = scmp.lt.s32.totalorder %s15, 4
      %p179 = pnand %p177, %p178
      %p180 = pneg %p179
      // Predicated region
      $region25: #{tpu_custom_call.1} parent=5 // pred_check
        _
      $region26: #{tpu_custom_call.1} parent=5 // pred_check_branch
        %182 = sbr.rel (%p179) target = $region28
      $region27: #{tpu_custom_call.1} parent=5 // pred_region
        %s183 = ssub.s32 %s15, 1
        // Predicated region
        $region29: #{tpu_custom_call.1} parent=27 // pred_check
          %p184 = pneg %p62
        $region30: #{tpu_custom_call.1} parent=27 // pred_check_branch
          %186 = sbr.rel (%p184) target = $region32
        $region31: #{tpu_custom_call.1} parent=27 // pred_region
          %187 = dma.done [#allocation4], 2048
        $region32: #{tpu_custom_call.1} parent=27 // pred_fallthru
          _
        %s188 = sand.u32 %s77, 1
        %s189 = scalar_lea.sflag [#allocation7], %s188
        %s190 = sand.u32 %s77, 1
        %s191 = smul.addr %s190, 64
        %s192 = scalar_lea.vmem [#allocation6], %s191
        // Predicated region
        $region33: #{tpu_custom_call.1} parent=27 // pred_check
          %p193 = pneg %p90
        $region34: #{tpu_custom_call.1} parent=27 // pred_check_branch
          %195 = sbr.rel (%p193) target = $region36
        $region35: #{tpu_custom_call.1} parent=27 // pred_region
          %196 = dma.done %s189, 1024
        $region36: #{tpu_custom_call.1} parent=27 // pred_fallthru
          _
        %p197 = pneg %p62
        %p198 = pneg %p59
        %s199 = sand.u32 %s77, 1
        %s200 = scalar_lea.sflag [#allocation7], %s199
        %s201 = sand.u32 %s77, 1
        %s202 = smul.addr %s201, 64
        %s203 = scalar_lea.vmem [#allocation6], %s202
        %p204 = pneg %p90
        %p205 = pneg %p87
        %p206 = pneg %p118
        %p207 = pneg %p115
        %s208 = sand.u32 %s105, 1
        %s209 = scalar_lea.sflag [#allocation5], %s208
        %s210 = sand.u32 %s105, 1
        %s211 = smul.addr %s210, 128
        %s212 = scalar_lea.vmem [#allocation8], %s211
        %s213 = smul.u32 32, %s25
        %s214 = smul.u32 16, %s27
        %s215 = smul.u32 32, %s25
        %p217 = scmp.eq.s32.totalorder %s27, 0
        // Predicated region
        $region37: #{tpu_custom_call.1} parent=27 // pred_check
          %p218 = pneg %p217
        $region38: #{tpu_custom_call.1} parent=27 // pred_check_branch
          %220 = sbr.rel (%p218) target = $region40
        $region39: #{tpu_custom_call.1} parent=27 // pred_region
          %221 = vst [vmem:[#allocation2] sm:$0xff] 0.0
          %222 = vst [vmem:[#allocation2 + $0x8] sm:$0xff] 0.0
          %223 = vst [vmem:[#allocation2 + $0x10] sm:$0xff] 0.0
          %224 = vst [vmem:[#allocation2 + $0x18] sm:$0xff] 0.0
          %225 = vst [vmem:[#allocation2 + $0x20] sm:$0xff] 0.0
          %226 = vst [vmem:[#allocation2 + $0x28] sm:$0xff] 0.0
          %227 = vst [vmem:[#allocation2 + $0x30] sm:$0xff] 0.0
          %228 = vst [vmem:[#allocation2 + $0x38] sm:$0xff] 0.0
          %229 = vst [vmem:[#allocation2 + $0x40] sm:$0xff] 0.0
          %230 = vst [vmem:[#allocation2 + $0x48] sm:$0xff] 0.0
          %231 = vst [vmem:[#allocation2 + $0x50] sm:$0xff] 0.0
          %232 = vst [vmem:[#allocation2 + $0x58] sm:$0xff] 0.0
          %233 = vst [vmem:[#allocation2 + $0x60] sm:$0xff] 0.0
          %234 = vst [vmem:[#allocation2 + $0x68] sm:$0xff] 0.0
          %235 = vst [vmem:[#allocation2 + $0x70] sm:$0xff] 0.0
          %236 = vst [vmem:[#allocation2 + $0x78] sm:$0xff] 0.0
          %237 = vst [vmem:[#allocation2 + $0x80] sm:$0xff] 0.0
          %238 = vst [vmem:[#allocation2 + $0x88] sm:$0xff] 0.0
          %239 = vst [vmem:[#allocation2 + $0x90] sm:$0xff] 0.0
          %240 = vst [vmem:[#allocation2 + $0x98] sm:$0xff] 0.0
          %241 = vst [vmem:[#allocation2 + $0xa0] sm:$0xff] 0.0
          %242 = vst [vmem:[#allocation2 + $0xa8] sm:$0xff] 0.0
          %243 = vst [vmem:[#allocation2 + $0xb0] sm:$0xff] 0.0
          %244 = vst [vmem:[#allocation2 + $0xb8] sm:$0xff] 0.0
          %245 = vst [vmem:[#allocation2 + $0xc0] sm:$0xff] 0.0
          %246 = vst [vmem:[#allocation2 + $0xc8] sm:$0xff] 0.0
          %247 = vst [vmem:[#allocation2 + $0xd0] sm:$0xff] 0.0
          %248 = vst [vmem:[#allocation2 + $0xd8] sm:$0xff] 0.0
          %249 = vst [vmem:[#allocation2 + $0xe0] sm:$0xff] 0.0
          %250 = vst [vmem:[#allocation2 + $0xe8] sm:$0xff] 0.0
          %251 = vst [vmem:[#allocation2 + $0xf0] sm:$0xff] 0.0
          %252 = vst [vmem:[#allocation2 + $0xf8] sm:$0xff] 0.0
        $region40: #{tpu_custom_call.1} parent=27 // pred_fallthru
          _
        %v253 = vld [vmem:[#allocation2] sm:$0xff]
        %v254 = vld [vmem:[#allocation2 + $0x8] sm:$0xff]
        %v255 = vld [vmem:[#allocation2 + $0x10] sm:$0xff]
        %v256 = vld [vmem:[#allocation2 + $0x18] sm:$0xff]
        %v257 = vld [vmem:[#allocation2 + $0x20] sm:$0xff]
        %v258 = vld [vmem:[#allocation2 + $0x28] sm:$0xff]
        %v259 = vld [vmem:[#allocation2 + $0x30] sm:$0xff]
        %v260 = vld [vmem:[#allocation2 + $0x38] sm:$0xff]
        %v261 = vld [vmem:[#allocation2 + $0x40] sm:$0xff]
        %v262 = vld [vmem:[#allocation2 + $0x48] sm:$0xff]
        %v263 = vld [vmem:[#allocation2 + $0x50] sm:$0xff]
        %v264 = vld [vmem:[#allocation2 + $0x58] sm:$0xff]
        %v265 = vld [vmem:[#allocation2 + $0x60] sm:$0xff]
        %v266 = vld [vmem:[#allocation2 + $0x68] sm:$0xff]
        %v267 = vld [vmem:[#allocation2 + $0x70] sm:$0xff]
        %v268 = vld [vmem:[#allocation2 + $0x78] sm:$0xff]
        %v269 = vld [vmem:[#allocation2 + $0x80] sm:$0xff]
        %v270 = vld [vmem:[#allocation2 + $0x88] sm:$0xff]
        %v271 = vld [vmem:[#allocation2 + $0x90] sm:$0xff]
        %v272 = vld [vmem:[#allocation2 + $0x98] sm:$0xff]
        %v273 = vld [vmem:[#allocation2 + $0xa0] sm:$0xff]
        %v274 = vld [vmem:[#allocation2 + $0xa8] sm:$0xff]
        %v275 = vld [vmem:[#allocation2 + $0xb0] sm:$0xff]
        %v276 = vld [vmem:[#allocation2 + $0xb8] sm:$0xff]
        %v277 = vld [vmem:[#allocation2 + $0xc0] sm:$0xff]
        %v278 = vld [vmem:[#allocation2 + $0xc8] sm:$0xff]
        %v279 = vld [vmem:[#allocation2 + $0xd0] sm:$0xff]
        %v280 = vld [vmem:[#allocation2 + $0xd8] sm:$0xff]
        %v281 = vld [vmem:[#allocation2 + $0xe0] sm:$0xff]
        %v282 = vld [vmem:[#allocation2 + $0xe8] sm:$0xff]
        %v283 = vld [vmem:[#allocation2 + $0xf0] sm:$0xff]
        %v284 = vld [vmem:[#allocation2 + $0xf8] sm:$0xff]
        %v285 = vld [vmem:[#allocation3] sm:$0xf]
        %v286 = vld [vmem:[#allocation3 + $0x4] sm:$0xf]
        %v287 = vld [vmem:[#allocation3 + $0x8] sm:$0xf]
        %v288 = vld [vmem:[#allocation3 + $0xc] sm:$0xf]
        %v289 = vld [vmem:[#allocation3 + $0x10] sm:$0xf]
        %v290 = vld [vmem:[#allocation3 + $0x14] sm:$0xf]
        %v291 = vld [vmem:[#allocation3 + $0x18] sm:$0xf]
        %v292 = vld [vmem:[#allocation3 + $0x1c] sm:$0xf]
        %v293 = vld [vmem:[#allocation3 + $0x20] sm:$0xf]
        %v294 = vld [vmem:[#allocation3 + $0x24] sm:$0xf]
        %v295 = vld [vmem:[#allocation3 + $0x28] sm:$0xf]
        %v296 = vld [vmem:[#allocation3 + $0x2c] sm:$0xf]
        %v297 = vld [vmem:[#allocation3 + $0x30] sm:$0xf]
        %v298 = vld [vmem:[#allocation3 + $0x34] sm:$0xf]
        %v299 = vld [vmem:[#allocation3 + $0x38] sm:$0xf]
        %v300 = vld [vmem:[#allocation3 + $0x3c] sm:$0xf]
        %v301 = vld [vmem:[#allocation3 + $0x40] sm:$0xf]
        %v302 = vld [vmem:[#allocation3 + $0x44] sm:$0xf]
        %v303 = vld [vmem:[#allocation3 + $0x48] sm:$0xf]
        %v304 = vld [vmem:[#allocation3 + $0x4c] sm:$0xf]
        %v305 = vld [vmem:[#allocation3 + $0x50] sm:$0xf]
        %v306 = vld [vmem:[#allocation3 + $0x54] sm:$0xf]
        %v307 = vld [vmem:[#allocation3 + $0x58] sm:$0xf]
        %v308 = vld [vmem:[#allocation3 + $0x5c] sm:$0xf]
        %v309 = vld [vmem:[#allocation3 + $0x60] sm:$0xf]
        %v310 = vld [vmem:[#allocation3 + $0x64] sm:$0xf]
        %v311 = vld [vmem:[#allocation3 + $0x68] sm:$0xf]
        %v312 = vld [vmem:[#allocation3 + $0x6c] sm:$0xf]
        %v313 = vld [vmem:[#allocation3 + $0x70] sm:$0xf]
        %v314 = vld [vmem:[#allocation3 + $0x74] sm:$0xf]
        %v315 = vld [vmem:[#allocation3 + $0x78] sm:$0xf]
        %v316 = vld [vmem:[#allocation3 + $0x7c] sm:$0xf]
        %v317 = vld [vmem:[%s192] sm:$0xf]
        %v318 = vld [vmem:[%s192 + $0x4] sm:$0xf]
        %v319 = vld [vmem:[%s192 + $0x8] sm:$0xf]
        %v320 = vld [vmem:[%s192 + $0xc] sm:$0xf]
        %v321 = vld [vmem:[%s192 + $0x10] sm:$0xf]
        %v322 = vld [vmem:[%s192 + $0x14] sm:$0xf]
        %v323 = vld [vmem:[%s192 + $0x18] sm:$0xf]
        %v324 = vld [vmem:[%s192 + $0x1c] sm:$0xf]
        %v325 = vld [vmem:[%s192 + $0x20] sm:$0xf]
        %v326 = vld [vmem:[%s192 + $0x24] sm:$0xf]
        %v327 = vld [vmem:[%s192 + $0x28] sm:$0xf]
        %v328 = vld [vmem:[%s192 + $0x2c] sm:$0xf]
        %v329 = vld [vmem:[%s192 + $0x30] sm:$0xf]
        %v330 = vld [vmem:[%s192 + $0x34] sm:$0xf]
        %v331 = vld [vmem:[%s192 + $0x38] sm:$0xf]
        %v332 = vld [vmem:[%s192 + $0x3c] sm:$0xf]
        %v365 = vunpack.c.l.b16 %v285
        %v366 = vunpack.c.l.b16 %v286
        %v367 = vunpack.c.l.b16 %v287
        %v368 = vunpack.c.l.b16 %v288
        %v369 = vunpack.c.l.b16 %v289
        %v370 = vunpack.c.l.b16 %v290
        %v371 = vunpack.c.l.b16 %v291
        %v372 = vunpack.c.l.b16 %v292
        %v373 = vunpack.c.l.b16 %v293
        %v374 = vunpack.c.l.b16 %v294
        %v375 = vunpack.c.l.b16 %v295
        %v376 = vunpack.c.l.b16 %v296
        %v377 = vunpack.c.l.b16 %v297
        %v378 = vunpack.c.l.b16 %v298
        %v379 = vunpack.c.l.b16 %v299
        %v380 = vunpack.c.l.b16 %v300
        %v381 = vunpack.c.l.b16 %v301
        %v382 = vunpack.c.l.b16 %v302
        %v383 = vunpack.c.l.b16 %v303
        %v384 = vunpack.c.l.b16 %v304
        %v385 = vunpack.c.l.b16 %v305
        %v386 = vunpack.c.l.b16 %v306
        %v387 = vunpack.c.l.b16 %v307
        %v388 = vunpack.c.l.b16 %v308
        %v389 = vunpack.c.l.b16 %v309
        %v390 = vunpack.c.l.b16 %v310
        %v391 = vunpack.c.l.b16 %v311
        %v392 = vunpack.c.l.b16 %v312
        %v393 = vunpack.c.l.b16 %v313
        %v394 = vunpack.c.l.b16 %v314
        %v395 = vunpack.c.l.b16 %v315
        %v396 = vunpack.c.l.b16 %v316
        %v397 = vpack.c.b16 %v366, %v365
        %v398 = vpack.c.b16 %v368, %v367
        %v399 = vpack.c.b16 %v370, %v369
        %v400 = vpack.c.b16 %v372, %v371
        %v401 = vpack.c.b16 %v374, %v373
        %v402 = vpack.c.b16 %v376, %v375
        %v403 = vpack.c.b16 %v378, %v377
        %v404 = vpack.c.b16 %v380, %v379
        %v405 = vpack.c.b16 %v382, %v381
        %v406 = vpack.c.b16 %v384, %v383
        %v407 = vpack.c.b16 %v386, %v385
        %v408 = vpack.c.b16 %v388, %v387
        %v409 = vpack.c.b16 %v390, %v389
        %v410 = vpack.c.b16 %v392, %v391
        %v411 = vpack.c.b16 %v394, %v393
        %v412 = vpack.c.b16 %v396, %v395
        %v445 = vunpack.c.l.b16 %v317
        %v446 = vunpack.c.l.b16 %v318
        %v447 = vunpack.c.l.b16 %v319
        %v448 = vunpack.c.l.b16 %v320
        %v449 = vunpack.c.l.b16 %v321
        %v450 = vunpack.c.l.b16 %v322
        %v451 = vunpack.c.l.b16 %v323
        %v452 = vunpack.c.l.b16 %v324
        %v453 = vunpack.c.l.b16 %v325
        %v454 = vunpack.c.l.b16 %v326
        %v455 = vunpack.c.l.b16 %v327
        %v456 = vunpack.c.l.b16 %v328
        %v457 = vunpack.c.l.b16 %v329
        %v458 = vunpack.c.l.b16 %v330
        %v459 = vunpack.c.l.b16 %v331
        %v460 = vunpack.c.l.b16 %v332
        %v461 = vpack.c.b16 %v446, %v445
        %v462 = vpack.c.b16 %v448, %v447
        %v463 = vpack.c.b16 %v450, %v449
        %v464 = vpack.c.b16 %v452, %v451
        %v465 = vpack.c.b16 %v454, %v453
        %v466 = vpack.c.b16 %v456, %v455
        %v467 = vpack.c.b16 %v458, %v457
        %v468 = vpack.c.b16 %v460, %v459
        %477 = vmatprep.subr.bf16.mxu0 0
        %478 = vmatpush1.bf16.msra.mxu0 %v461
        %479 = vmatprep.subr.bf16.mxu0 0
        %480 = vmatpush1.bf16.msra.mxu0 %v462
        %481 = vmatprep.subr.bf16.mxu0 0
        %482 = vmatpush1.bf16.msra.mxu0 %v463
        %483 = vmatprep.subr.bf16.mxu0 0
        %484 = vmatpush1.bf16.msra.mxu0 %v464
        %485 = vmatprep.subr.bf16.mxu0 0
        %486 = vmatpush1.bf16.msra.mxu0 %v465
        %487 = vmatprep.subr.bf16.mxu0 0
        %488 = vmatpush1.bf16.msra.mxu0 %v466
        %489 = vmatprep.subr.bf16.mxu0 0
        %490 = vmatpush1.bf16.msra.mxu0 %v467
        %491 = vmatprep.subr.bf16.mxu0 0
        %492 = vmatpush1.bf16.msra.mxu0 %v468
        %493 = vmatprep.subr.bf16.mxu0 0
        %494 = vmatpush1.bf16.msra.mxu0 0
        %495 = vmatprep.subr.bf16.mxu0 0
        %496 = vmatpush1.bf16.msra.mxu0 0
        %497 = vmatprep.subr.bf16.mxu0 0
        %498 = vmatpush1.bf16.msra.mxu0 0
        %499 = vmatprep.subr.bf16.mxu0 0
        %500 = vmatpush1.bf16.msra.mxu0 0
        %501 = vmatprep.subr.bf16.mxu0 0
        %502 = vmatpush1.bf16.msra.mxu0 0
        %503 = vmatprep.subr.bf16.mxu0 0
        %504 = vmatpush1.bf16.msra.mxu0 0
        %505 = vmatprep.subr.bf16.mxu0 0
        %506 = vmatpush1.bf16.msra.mxu0 0
        %507 = vmatprep.subr.bf16.mxu0 0
        %508 = vmatpush1.bf16.msra.mxu0 0
        %509 = vmatprep.mubr.bf16.mxu0 0
        %510 = vmatmul.mubr.bf16.gmra.mrb[0].mxu0 %v397
        %v511 = vpop.f32.mrb[0].mxu0
        %v512 = vadd.f32 0.0, %v511
        %v513 = vpop.f32.mrb[0].mxu0
        %v514 = vpop.f32.mrb[0].mxu0
        %v515 = vadd.f32 0.0, %v514
        %v516 = vpop.f32.mrb[0].mxu0
        %517 = vmatprep.mubr.bf16.mxu0 0
        %518 = vmatmul.mubr.bf16.gmra.mrb[0].mxu0 %v398
        %v519 = vpop.f32.mrb[0].mxu0
        %v520 = vadd.f32 0.0, %v519
        %v521 = vpop.f32.mrb[0].mxu0
        %v522 = vpop.f32.mrb[0].mxu0
        %v523 = vadd.f32 0.0, %v522
        %v524 = vpop.f32.mrb[0].mxu0
        %525 = vmatprep.mubr.bf16.mxu0 0
        %526 = vmatmul.mubr.bf16.gmra.mrb[0].mxu0 %v399
        %v527 = vpop.f32.mrb[0].mxu0
        %v528 = vadd.f32 0.0, %v527
        %v529 = vpop.f32.mrb[0].mxu0
        %v530 = vpop.f32.mrb[0].mxu0
        %v531 = vadd.f32 0.0, %v530
        %v532 = vpop.f32.mrb[0].mxu0
        %533 = vmatprep.mubr.bf16.mxu0 0
        %534 = vmatmul.mubr.bf16.gmra.mrb[0].mxu0 %v400
        %v535 = vpop.f32.mrb[0].mxu0
        %v536 = vadd.f32 0.0, %v535
        %v537 = vpop.f32.mrb[0].mxu0
        %v538 = vpop.f32.mrb[0].mxu0
        %v539 = vadd.f32 0.0, %v538
        %v540 = vpop.f32.mrb[0].mxu0
        %541 = vmatprep.mubr.bf16.mxu0 0
        %542 = vmatmul.mubr.bf16.gmra.mrb[0].mxu0 %v401
        %v543 = vpop.f32.mrb[0].mxu0
        %v544 = vadd.f32 0.0, %v543
        %v545 = vpop.f32.mrb[0].mxu0
        %v546 = vpop.f32.mrb[0].mxu0
        %v547 = vadd.f32 0.0, %v546
        %v548 = vpop.f32.mrb[0].mxu0
        %549 = vmatprep.mubr.bf16.mxu0 0
        %550 = vmatmul.mubr.bf16.gmra.mrb[0].mxu0 %v402
        %v551 = vpop.f32.mrb[0].mxu0
        %v552 = vadd.f32 0.0, %v551
        %v553 = vpop.f32.mrb[0].mxu0
        %v554 = vpop.f32.mrb[0].mxu0
        %v555 = vadd.f32 0.0, %v554
        %v556 = vpop.f32.mrb[0].mxu0
        %557 = vmatprep.mubr.bf16.mxu0 0
        %558 = vmatmul.mubr.bf16.gmra.mrb[0].mxu0 %v403
        %v559 = vpop.f32.mrb[0].mxu0
        %v560 = vadd.f32 0.0, %v559
        %v561 = vpop.f32.mrb[0].mxu0
        %v562 = vpop.f32.mrb[0].mxu0
        %v563 = vadd.f32 0.0, %v562
        %v564 = vpop.f32.mrb[0].mxu0
        %565 = vmatprep.mubr.bf16.mxu0 0
        %566 = vmatmul.mubr.bf16.gmra.mrb[0].mxu0 %v404
        %v567 = vpop.f32.mrb[0].mxu0
        %v568 = vadd.f32 0.0, %v567
        %v569 = vpop.f32.mrb[0].mxu0
        %v570 = vpop.f32.mrb[0].mxu0
        %v571 = vadd.f32 0.0, %v570
        %v572 = vpop.f32.mrb[0].mxu0
        %573 = vmatprep.mubr.bf16.mxu0 0
        %574 = vmatmul.mubr.bf16.gmra.mrb[0].mxu0 %v405
        %v575 = vpop.f32.mrb[0].mxu0
        %v576 = vadd.f32 0.0, %v575
        %v577 = vpop.f32.mrb[0].mxu0
        %v578 = vpop.f32.mrb[0].mxu0
        %v579 = vadd.f32 0.0, %v578
        %v580 = vpop.f32.mrb[0].mxu0
        %581 = vmatprep.mubr.bf16.mxu0 0
        %582 = vmatmul.mubr.bf16.gmra.mrb[0].mxu0 %v406
        %v583 = vpop.f32.mrb[0].mxu0
        %v584 = vadd.f32 0.0, %v583
        %v585 = vpop.f32.mrb[0].mxu0
        %v586 = vpop.f32.mrb[0].mxu0
        %v587 = vadd.f32 0.0, %v586
        %v588 = vpop.f32.mrb[0].mxu0
        %589 = vmatprep.mubr.bf16.mxu0 0
        %590 = vmatmul.mubr.bf16.gmra.mrb[0].mxu0 %v407
        %v591 = vpop.f32.mrb[0].mxu0
        %v592 = vadd.f32 0.0, %v591
        %v593 = vpop.f32.mrb[0].mxu0
        %v594 = vpop.f32.mrb[0].mxu0
        %v595 = vadd.f32 0.0, %v594
        %v596 = vpop.f32.mrb[0].mxu0
        %597 = vmatprep.mubr.bf16.mxu0 0
        %598 = vmatmul.mubr.bf16.gmra.mrb[0].mxu0 %v408
        %v599 = vpop.f32.mrb[0].mxu0
        %v600 = vadd.f32 0.0, %v599
        %v601 = vpop.f32.mrb[0].mxu0
        %v602 = vpop.f32.mrb[0].mxu0
        %v603 = vadd.f32 0.0, %v602
        %v604 = vpop.f32.mrb[0].mxu0
        %605 = vmatprep.mubr.bf16.mxu0 0
        %606 = vmatmul.mubr.bf16.gmra.mrb[0].mxu0 %v409
        %v607 = vpop.f32.mrb[0].mxu0
        %v608 = vadd.f32 0.0, %v607
        %v609 = vpop.f32.mrb[0].mxu0
        %v610 = vpop.f32.mrb[0].mxu0
        %v611 = vadd.f32 0.0, %v610
        %v612 = vpop.f32.mrb[0].mxu0
        %613 = vmatprep.mubr.bf16.mxu0 0
        %614 = vmatmul.mubr.bf16.gmra.mrb[0].mxu0 %v410
        %v615 = vpop.f32.mrb[0].mxu0
        %v616 = vadd.f32 0.0, %v615
        %v617 = vpop.f32.mrb[0].mxu0
        %v618 = vpop.f32.mrb[0].mxu0
        %v619 = vadd.f32 0.0, %v618
        %v620 = vpop.f32.mrb[0].mxu0
        %621 = vmatprep.mubr.bf16.mxu0 0
        %622 = vmatmul.mubr.bf16.gmra.mrb[0].mxu0 %v411
        %v623 = vpop.f32.mrb[0].mxu0
        %v624 = vadd.f32 0.0, %v623
        %v625 = vpop.f32.mrb[0].mxu0
        %v626 = vpop.f32.mrb[0].mxu0
        %v627 = vadd.f32 0.0, %v626
        %v628 = vpop.f32.mrb[0].mxu0
        %629 = vmatprep.mubr.bf16.mxu0 0
        %630 = vmatmul.mubr.bf16.gmra.mrb[0].mxu0 %v412
        %v631 = vpop.f32.mrb[0].mxu0
        %v632 = vadd.f32 0.0, %v631
        %v633 = vpop.f32.mrb[0].mxu0
        %v634 = vpop.f32.mrb[0].mxu0
        %v635 = vadd.f32 0.0, %v634
        %v636 = vpop.f32.mrb[0].mxu0
        %637 = vdwg.mxu0
        %v638 = vadd.f32 %v253, %v512
        %v639 = vadd.f32 %v254, %v515
        %v640 = vadd.f32 %v255, %v520
        %v641 = vadd.f32 %v256, %v523
        %v642 = vadd.f32 %v257, %v528
        %v643 = vadd.f32 %v258, %v531
        %v644 = vadd.f32 %v259, %v536
        %v645 = vadd.f32 %v260, %v539
        %v646 = vadd.f32 %v261, %v544
        %v647 = vadd.f32 %v262, %v547
        %v648 = vadd.f32 %v263, %v552
        %v649 = vadd.f32 %v264, %v555
        %v650 = vadd.f32 %v265, %v560
        %v651 = vadd.f32 %v266, %v563
        %v652 = vadd.f32 %v267, %v568
        %v653 = vadd.f32 %v268, %v571
        %v654 = vadd.f32 %v269, %v576
        %v655 = vadd.f32 %v270, %v579
        %v656 = vadd.f32 %v271, %v584
        %v657 = vadd.f32 %v272, %v587
        %v658 = vadd.f32 %v273, %v592
        %v659 = vadd.f32 %v274, %v595
        %v660 = vadd.f32 %v275, %v600
        %v661 = vadd.f32 %v276, %v603
        %v662 = vadd.f32 %v277, %v608
        %v663 = vadd.f32 %v278, %v611
        %v664 = vadd.f32 %v279, %v616
        %v665 = vadd.f32 %v280, %v619
        %v666 = vadd.f32 %v281, %v624
        %v667 = vadd.f32 %v282, %v627
        %v668 = vadd.f32 %v283, %v632
        %v669 = vadd.f32 %v284, %v635
        %670 = vst [vmem:[#allocation2] sm:$0xff] %v638
        %671 = vst [vmem:[#allocation2 + $0x8] sm:$0xff] %v639
        %672 = vst [vmem:[#allocation2 + $0x10] sm:$0xff] %v640
        %673 = vst [vmem:[#allocation2 + $0x18] sm:$0xff] %v641
        %674 = vst [vmem:[#allocation2 + $0x20] sm:$0xff] %v642
        %675 = vst [vmem:[#allocation2 + $0x28] sm:$0xff] %v643
        %676 = vst [vmem:[#allocation2 + $0x30] sm:$0xff] %v644
        %677 = vst [vmem:[#allocation2 + $0x38] sm:$0xff] %v645
        %678 = vst [vmem:[#allocation2 + $0x40] sm:$0xff] %v646
        %679 = vst [vmem:[#allocation2 + $0x48] sm:$0xff] %v647
        %680 = vst [vmem:[#allocation2 + $0x50] sm:$0xff] %v648
        %681 = vst [vmem:[#allocation2 + $0x58] sm:$0xff] %v649
        %682 = vst [vmem:[#allocation2 + $0x60] sm:$0xff] %v650
        %683 = vst [vmem:[#allocation2 + $0x68] sm:$0xff] %v651
        %684 = vst [vmem:[#allocation2 + $0x70] sm:$0xff] %v652
        %685 = vst [vmem:[#allocation2 + $0x78] sm:$0xff] %v653
        %686 = vst [vmem:[#allocation2 + $0x80] sm:$0xff] %v654
        %687 = vst [vmem:[#allocation2 + $0x88] sm:$0xff] %v655
        %688 = vst [vmem:[#allocation2 + $0x90] sm:$0xff] %v656
        %689 = vst [vmem:[#allocation2 + $0x98] sm:$0xff] %v657
        %690 = vst [vmem:[#allocation2 + $0xa0] sm:$0xff] %v658
        %691 = vst [vmem:[#allocation2 + $0xa8] sm:$0xff] %v659
        %692 = vst [vmem:[#allocation2 + $0xb0] sm:$0xff] %v660
        %693 = vst [vmem:[#allocation2 + $0xb8] sm:$0xff] %v661
        %694 = vst [vmem:[#allocation2 + $0xc0] sm:$0xff] %v662
        %695 = vst [vmem:[#allocation2 + $0xc8] sm:$0xff] %v663
        %696 = vst [vmem:[#allocation2 + $0xd0] sm:$0xff] %v664
        %697 = vst [vmem:[#allocation2 + $0xd8] sm:$0xff] %v665
        %698 = vst [vmem:[#allocation2 + $0xe0] sm:$0xff] %v666
        %699 = vst [vmem:[#allocation2 + $0xe8] sm:$0xff] %v667
        %700 = vst [vmem:[#allocation2 + $0xf0] sm:$0xff] %v668
        %701 = vst [vmem:[#allocation2 + $0xf8] sm:$0xff] %v669
        // Predicated region
        $region41: #{tpu_custom_call.1} parent=27 // pred_check
          %p702 = pneg %p217
        $region42: #{tpu_custom_call.1} parent=27 // pred_check_branch
          %704 = sbr.rel (%p702) target = $region44
        $region43: #{tpu_custom_call.1} parent=27 // pred_region
          %v705 = vld [vmem:[#allocation2] sm:$0xff]
          %v706 = vld [vmem:[#allocation2 + $0x8] sm:$0xff]
          %v707 = vld [vmem:[#allocation2 + $0x10] sm:$0xff]
          %v708 = vld [vmem:[#allocation2 + $0x18] sm:$0xff]
          %v709 = vld [vmem:[#allocation2 + $0x20] sm:$0xff]
          %v710 = vld [vmem:[#allocation2 + $0x28] sm:$0xff]
          %v711 = vld [vmem:[#allocation2 + $0x30] sm:$0xff]
          %v712 = vld [vmem:[#allocation2 + $0x38] sm:$0xff]
          %v713 = vld [vmem:[#allocation2 + $0x40] sm:$0xff]
          %v714 = vld [vmem:[#allocation2 + $0x48] sm:$0xff]
          %v715 = vld [vmem:[#allocation2 + $0x50] sm:$0xff]
          %v716 = vld [vmem:[#allocation2 + $0x58] sm:$0xff]
          %v717 = vld [vmem:[#allocation2 + $0x60] sm:$0xff]
          %v718 = vld [vmem:[#allocation2 + $0x68] sm:$0xff]
          %v719 = vld [vmem:[#allocation2 + $0x70] sm:$0xff]
          %v720 = vld [vmem:[#allocation2 + $0x78] sm:$0xff]
          %v721 = vld [vmem:[#allocation2 + $0x80] sm:$0xff]
          %v722 = vld [vmem:[#allocation2 + $0x88] sm:$0xff]
          %v723 = vld [vmem:[#allocation2 + $0x90] sm:$0xff]
          %v724 = vld [vmem:[#allocation2 + $0x98] sm:$0xff]
          %v725 = vld [vmem:[#allocation2 + $0xa0] sm:$0xff]
          %v726 = vld [vmem:[#allocation2 + $0xa8] sm:$0xff]
          %v727 = vld [vmem:[#allocation2 + $0xb0] sm:$0xff]
          %v728 = vld [vmem:[#allocation2 + $0xb8] sm:$0xff]
          %v729 = vld [vmem:[#allocation2 + $0xc0] sm:$0xff]
          %v730 = vld [vmem:[#allocation2 + $0xc8] sm:$0xff]
          %v731 = vld [vmem:[#allocation2 + $0xd0] sm:$0xff]
          %v732 = vld [vmem:[#allocation2 + $0xd8] sm:$0xff]
          %v733 = vld [vmem:[#allocation2 + $0xe0] sm:$0xff]
          %v734 = vld [vmem:[#allocation2 + $0xe8] sm:$0xff]
          %v735 = vld [vmem:[#allocation2 + $0xf0] sm:$0xff]
          %v736 = vld [vmem:[#allocation2 + $0xf8] sm:$0xff]
          %v737 = vpack.c.bf16 %v706, %v705
          %v738 = vpack.c.bf16 %v708, %v707
          %v739 = vpack.c.bf16 %v710, %v709
          %v740 = vpack.c.bf16 %v712, %v711
          %v741 = vpack.c.bf16 %v714, %v713
          %v742 = vpack.c.bf16 %v716, %v715
          %v743 = vpack.c.bf16 %v718, %v717
          %v744 = vpack.c.bf16 %v720, %v719
          %v745 = vpack.c.bf16 %v722, %v721
          %v746 = vpack.c.bf16 %v724, %v723
          %v747 = vpack.c.bf16 %v726, %v725
          %v748 = vpack.c.bf16 %v728, %v727
          %v749 = vpack.c.bf16 %v730, %v729
          %v750 = vpack.c.bf16 %v732, %v731
          %v751 = vpack.c.bf16 %v734, %v733
          %v752 = vpack.c.bf16 %v736, %v735
          %v769 = vunpack.c.l.b16 %v737
          %v770 = vunpack.c.h.b16 %v737
          %v771 = vunpack.c.l.b16 %v738
          %v772 = vunpack.c.h.b16 %v738
          %v773 = vunpack.c.l.b16 %v739
          %v774 = vunpack.c.h.b16 %v739
          %v775 = vunpack.c.l.b16 %v740
          %v776 = vunpack.c.h.b16 %v740
          %v777 = vunpack.c.l.b16 %v741
          %v778 = vunpack.c.h.b16 %v741
          %v779 = vunpack.c.l.b16 %v742
          %v780 = vunpack.c.h.b16 %v742
          %v781 = vunpack.c.l.b16 %v743
          %v782 = vunpack.c.h.b16 %v743
          %v783 = vunpack.c.l.b16 %v744
          %v784 = vunpack.c.h.b16 %v744
          %v785 = vunpack.c.l.b16 %v745
          %v786 = vunpack.c.h.b16 %v745
          %v787 = vunpack.c.l.b16 %v746
          %v788 = vunpack.c.h.b16 %v746
          %v789 = vunpack.c.l.b16 %v747
          %v790 = vunpack.c.h.b16 %v747
          %v791 = vunpack.c.l.b16 %v748
          %v792 = vunpack.c.h.b16 %v748
          %v793 = vunpack.c.l.b16 %v749
          %v794 = vunpack.c.h.b16 %v749
          %v795 = vunpack.c.l.b16 %v750
          %v796 = vunpack.c.h.b16 %v750
          %v797 = vunpack.c.l.b16 %v751
          %v798 = vunpack.c.h.b16 %v751
          %v799 = vunpack.c.l.b16 %v752
          %v800 = vunpack.c.h.b16 %v752
          %v801 = vpack.c.b16 %v769, %v769
          %v802 = vpack.c.b16 %v770, %v770
          %v803 = vpack.c.b16 %v771, %v771
          %v804 = vpack.c.b16 %v772, %v772
          %v805 = vpack.c.b16 %v773, %v773
          %v806 = vpack.c.b16 %v774, %v774
          %v807 = vpack.c.b16 %v775, %v775
          %v808 = vpack.c.b16 %v776, %v776
          %v809 = vpack.c.b16 %v777, %v777
          %v810 = vpack.c.b16 %v778, %v778
          %v811 = vpack.c.b16 %v779, %v779
          %v812 = vpack.c.b16 %v780, %v780
          %v813 = vpack.c.b16 %v781, %v781
          %v814 = vpack.c.b16 %v782, %v782
          %v815 = vpack.c.b16 %v783, %v783
          %v816 = vpack.c.b16 %v784, %v784
          %v817 = vpack.c.b16 %v785, %v785
          %v818 = vpack.c.b16 %v786, %v786
          %v819 = vpack.c.b16 %v787, %v787
          %v820 = vpack.c.b16 %v788, %v788
          %v821 = vpack.c.b16 %v789, %v789
          %v822 = vpack.c.b16 %v790, %v790
          %v823 = vpack.c.b16 %v791, %v791
          %v824 = vpack.c.b16 %v792, %v792
          %v825 = vpack.c.b16 %v793, %v793
          %v826 = vpack.c.b16 %v794, %v794
          %v827 = vpack.c.b16 %v795, %v795
          %v828 = vpack.c.b16 %v796, %v796
          %v829 = vpack.c.b16 %v797, %v797
          %v830 = vpack.c.b16 %v798, %v798
          %v831 = vpack.c.b16 %v799, %v799
          %v832 = vpack.c.b16 %v800, %v800
          %865 = vst [vmem:[%s212] sm:$0xf] %v801
          %866 = vst [vmem:[%s212 + $0x4] sm:$0xf] %v802
          %867 = vst [vmem:[%s212 + $0x8] sm:$0xf] %v803
          %868 = vst [vmem:[%s212 + $0xc] sm:$0xf] %v804
          %869 = vst [vmem:[%s212 + $0x10] sm:$0xf] %v805
          %870 = vst [vmem:[%s212 + $0x14] sm:$0xf] %v806
          %871 = vst [vmem:[%s212 + $0x18] sm:$0xf] %v807
          %872 = vst [vmem:[%s212 + $0x1c] sm:$0xf] %v808
          %873 = vst [vmem:[%s212 + $0x20] sm:$0xf] %v809
          %874 = vst [vmem:[%s212 + $0x24] sm:$0xf] %v810
          %875 = vst [vmem:[%s212 + $0x28] sm:$0xf] %v811
          %876 = vst [vmem:[%s212 + $0x2c] sm:$0xf] %v812
          %877 = vst [vmem:[%s212 + $0x30] sm:$0xf] %v813
          %878 = vst [vmem:[%s212 + $0x34] sm:$0xf] %v814
          %879 = vst [vmem:[%s212 + $0x38] sm:$0xf] %v815
          %880 = vst [vmem:[%s212 + $0x3c] sm:$0xf] %v816
          %881 = vst [vmem:[%s212 + $0x40] sm:$0xf] %v817
          %882 = vst [vmem:[%s212 + $0x44] sm:$0xf] %v818
          %883 = vst [vmem:[%s212 + $0x48] sm:$0xf] %v819
          %884 = vst [vmem:[%s212 + $0x4c] sm:$0xf] %v820
          %885 = vst [vmem:[%s212 + $0x50] sm:$0xf] %v821
          %886 = vst [vmem:[%s212 + $0x54] sm:$0xf] %v822
          %887 = vst [vmem:[%s212 + $0x58] sm:$0xf] %v823
          %888 = vst [vmem:[%s212 + $0x5c] sm:$0xf] %v824
          %889 = vst [vmem:[%s212 + $0x60] sm:$0xf] %v825
          %890 = vst [vmem:[%s212 + $0x64] sm:$0xf] %v826
          %891 = vst [vmem:[%s212 + $0x68] sm:$0xf] %v827
          %892 = vst [vmem:[%s212 + $0x6c] sm:$0xf] %v828
          %893 = vst [vmem:[%s212 + $0x70] sm:$0xf] %v829
          %894 = vst [vmem:[%s212 + $0x74] sm:$0xf] %v830
          %895 = vst [vmem:[%s212 + $0x78] sm:$0xf] %v831
          %896 = vst [vmem:[%s212 + $0x7c] sm:$0xf] %v832
        $region44: #{tpu_custom_call.1} parent=27 // pred_fallthru
          _
        %s897 = sand.u32 %s105, 1
        %s898 = scalar_lea.sflag [#allocation5], %s897
        %s899 = sand.u32 %s105, 1
        %s900 = smul.addr %s899, 128
        %s901 = scalar_lea.vmem [#allocation8], %s900
        // Predicated region
        $region45: #{tpu_custom_call.1} parent=27 // pred_check
          %p902 = pneg %p115
        $region46: #{tpu_custom_call.1} parent=27 // pred_check_branch
          %904 = sbr.rel (%p902) target = $region48
        $region47: #{tpu_custom_call.1} parent=27 // pred_region
          %s905 = smul.u32 32, %s25
          %s907 = ssub.s32 2048, 2048
          %908 = vsyncadd %s898, %s907
          %s909 = smul.addr %s905, 3
          %s910 = sadd.s32 %s26, %s909
          %s911 = smul.addr %s910, 64
          %s912 = scalar_lea.hbm %s2, %s911
          %s913 = sshll.u32 %s901, 4
          %s914 = int_to_ptr.vmem [resolvable:$true] %s913
          %919 = dma.vmem_to_hbm [thread:$0]  %s914, 2048, %s912, %s898, 64, 192, 4
        $region48: #{tpu_custom_call.1} parent=27 // pred_fallthru
          _
      $region28: #{tpu_custom_call.1} parent=5 // pred_fallthru
        _
      %p920 = scmp.le.s32.totalorder 2, %s15
      // Predicated region
      $region49: #{tpu_custom_call.1} parent=5 // pred_check
        %p921 = pneg %p920
      $region50: #{tpu_custom_call.1} parent=5 // pred_check_branch
        %923 = sbr.rel (%p921) target = $region52
      $region51: #{tpu_custom_call.1} parent=5 // pred_region
        %s924 = ssub.s32 %s15, 2
        // Predicated region
        $region53: #{tpu_custom_call.1} parent=51 // pred_check
          %p925 = pneg %p121
        $region54: #{tpu_custom_call.1} parent=51 // pred_check_branch
          %927 = sbr.rel (%p925) target = $region56
        $region55: #{tpu_custom_call.1} parent=51 // pred_region
          %s928 = sand.u32 %s106, 1
          %s929 = scalar_lea.sflag [#allocation5], %s928
          %s930 = sand.u32 %s106, 1
          %s931 = smul.addr %s930, 128
          %s932 = scalar_lea.vmem [#allocation8], %s931
          %933 = dma.done %s929, 2048
        $region56: #{tpu_custom_call.1} parent=51 // pred_fallthru
          _
      $region52: #{tpu_custom_call.1} parent=5 // pred_fallthru
        _
    $region6: #{tpu_custom_call.1} parent=1 // loop_footer
      %s19 = sadd.s32 1, %s15
    $region7: #{tpu_custom_call.1} parent=1 // loop_footer_branch
      %14 = sbr.rel target = $region3
    $region8: #{tpu_custom_call.1} parent=1 // loop_exit
      _
    %934 = vsyncpa [#allocation4], 1
    %s935 = scalar_lea.sflag [#allocation4], 1
    %936 = vsyncpa %s935, 1
    %937 = vsyncpa [#allocation7], 1
    %s938 = scalar_lea.sflag [#allocation7], 1
    %939 = vsyncpa %s938, 1
    %940 = vsyncpa [#allocation5], 1
    %s941 = scalar_lea.sflag [#allocation5], 1
    %942 = vsyncpa %s941, 1

</llo_original>
